<compile_context>
chip_gen: v7x
topology: tpu7x:2x2x1
jax: 0.10.0
libtpu: 0.0.40
codegen_flags: <defaults>
</compile_context>

<pallas_src>
import functools
import math

import jax
import jax.numpy as jnp
import numpy as np
from jax import lax
from jax.experimental import pallas as pl
from jax.experimental.pallas import tpu as pltpu

_LANE = 128
_SUBLANE = 8
_MAX_BLOCK_ROWS = 4096   # (4096,128) f32 block = 2 MiB; 2 inputs x 2 bufs = 8 MiB VMEM
_MAX_CHUNK_ROWS = 64     # (64,128) f32 = 8 vregs per intermediate -> no register spills
_MAX_UNROLL = 8


def _cdiv(a, b):
    return -(-a // b)


def _round_up(a, b):
    return _cdiv(a, b) * b


def _pow_small_int(x, gamma):
    """x ** gamma as a multiply chain when gamma is a small non-negative int."""
    g = float(gamma)
    if g == int(g) and 0 <= int(g) <= 8:
        gi = int(g)
        if gi == 0:
            return jnp.ones_like(x)
        r = x
        for _ in range(gi - 1):
            r = r * x
        return r
    return x ** g  # general (non-integer) gamma falls back to EUP pow


def _focal_loss_kernel(x_ref, t_ref, out_ref, *, gamma, n_valid,
                       block_rows, chunk_rows, needs_mask):
    c = pl.program_id(0)
    s = pl.program_id(1)

    @pl.when(s == 0)
    def _():
        out_ref[...] = jnp.zeros_like(out_ref)

    num_chunks = block_rows // chunk_rows
    # Flat element index of the first element of this *logical* block.  When the
    # logical block index exceeds the real block count (wasted slot of an odd
    # core split) every gidx >= n_valid, so the whole block masks to zero.
    base = (c * pl.num_programs(1) + s) * (block_rows * _LANE)

    if needs_mask:
        # Hoisted out of the chunk loop (broadcast/iota is not CSE'd by JAX).
        local = (lax.broadcasted_iota(jnp.int32, (chunk_rows, _LANE), 0) * _LANE
                 + lax.broadcasted_iota(jnp.int32, (chunk_rows, _LANE), 1))

    def chunk_body(i, acc):
        r0 = pl.multiple_of(i * chunk_rows, chunk_rows)
        x = x_ref[pl.ds(r0, chunk_rows), :].astype(jnp.float32)
        t = t_ref[pl.ds(r0, chunk_rows), :].astype(jnp.float32)
        # Stable binary cross-entropy with logits (identical formula to the
        # torch StableBCELoss / logits=True branches).
        bce = jnp.maximum(x, 0.0) - x * t + jnp.log1p(jnp.exp(-jnp.abs(x)))
        pt = jnp.exp(-bce)
        # TODO(synk): for strictly-binary targets, 1-pt can be derived from
        # exp(-|x|) with one fewer transcendental (sigmoid identity); kept in
        # the general form so soft targets remain exact.
        f = _pow_small_int(1.0 - pt, gamma) * bce
        if needs_mask:
            gidx = base + r0 * _LANE + local
            f = jnp.where(gidx < n_valid, f, 0.0)
        # Fold the (chunk_rows, 128) chunk onto one vreg-shaped (8, 128) sum.
        return acc + f.reshape(-1, _SUBLANE, _LANE).sum(axis=0)

    acc = lax.fori_loop(0, num_chunks, chunk_body,
                        jnp.zeros((_SUBLANE, _LANE), jnp.float32),
                        unroll=min(num_chunks, _MAX_UNROLL))
    # Output block index is constant across the reduction axis -> resident.
    out_ref[...] += acc


def focal_loss(inputs, targets, alpha=1.0, gamma=2.0):
    """Pallas TPU implementation of FocalLoss.forward with reduce=True."""
    x = inputs.reshape(-1)   # no dtype cast in the wrapper: stream native dtype
    t = targets.reshape(-1)
    n = x.shape[0]

    # Rows of the (rows, 128) 2D view, rounded so every block row count is a
    # multiple of 8 (sublane constraint).
    rows = _round_up(n, _SUBLANE * _LANE) // _LANE
    pad = rows * _LANE - n
    if pad:
        # TODO(synk): only hit when n % 1024 != 0.  For huge ragged inputs,
        # compute the <1024-element tail with plain jnp instead of this
        # whole-array pad copy.  Padded elements are masked inside the kernel.
        x = jnp.pad(x, (0, pad))
        t = jnp.pad(t, (0, pad))
    x2 = x.reshape(rows, _LANE)
    t2 = t.reshape(rows, _LANE)

    block_rows = min(_MAX_BLOCK_ROWS, rows)
    chunk_rows = math.gcd(block_rows, _MAX_CHUNK_ROWS)   # in {8, 16, 32, 64}
    blocks_total = _cdiv(rows, block_rows)

    # Leading "parallel" axis: split blocks over 2 halves for v7x megacore;
    # collapse to 1 when there is only one block (single-TC chips iterate the
    # axis serially anyway, so nothing is lost there).
    ncores = 2 if blocks_total >= 2 else 1
    steps = _cdiv(blocks_total, ncores)

    # Mask needed iff the grid covers more elements than n (partial last block,
    # odd core split, or lane padding).  Static trace-time decision.
    needs_mask = (ncores * steps * block_rows * _LANE) != n

    kernel = functools.partial(
        _focal_loss_kernel, gamma=float(gamma), n_valid=n,
        block_rows=block_rows, chunk_rows=chunk_rows, needs_mask=needs_mask)

    last_block = blocks_total - 1
    if ncores * steps == blocks_total:
        def in_map(c, s):
            return (c * steps + s, 0)
    else:
        def in_map(c, s):
            # Clamp the wasted slot onto a valid block; its contribution is
            # masked to zero inside the kernel.
            return (jnp.minimum(c * steps + s, last_block), 0)

    partials = pl.pallas_call(
        kernel,
        out_shape=jax.ShapeDtypeStruct((ncores, _SUBLANE, _LANE), jnp.float32),
        grid=(ncores, steps),
        in_specs=[
            pl.BlockSpec((block_rows, _LANE), in_map),
            pl.BlockSpec((block_rows, _LANE), in_map),
        ],
        out_specs=pl.BlockSpec((None, _SUBLANE, _LANE), lambda c, s: (c, 0, 0)),
        compiler_params=pltpu.CompilerParams(
            dimension_semantics=("parallel", "arbitrary"),
            vmem_limit_bytes=32 * 1024 * 1024,
        ),
    )(x2, t2)

    total = jnp.sum(partials)
    # alpha is a scalar factor -> hoisted out of the per-element kernel math.
    return jnp.float32(alpha) * total / jnp.float32(n)


def _focal_loss_ref(inputs, targets, alpha=1.0, gamma=2.0):
    x = inputs.astype(jnp.float32)
    t = targets.astype(jnp.float32)
    bce = jnp.maximum(x, 0.0) - x * t + jnp.log1p(jnp.exp(-jnp.abs(x)))
    pt = jnp.exp(-bce)
    return jnp.mean(alpha * (1.0 - pt) ** gamma * bce)


if __name__ == "__main__":
    key = jax.random.PRNGKey(0)
    k1, k2 = jax.random.split(key)
    # NCHW-style logits and binary targets, as the module would see them.
    x = jax.random.normal(k1, (2, 4, 16, 16), dtype=jnp.float32) * 2.0
    t = (jax.random.uniform(k2, (2, 4, 16, 16)) > 0.5).astype(jnp.float32)

    out = jax.block_until_ready(focal_loss(x, t, alpha=1.0, gamma=2.0))
    ref = jax.block_until_ready(_focal_loss_ref(x, t, alpha=1.0, gamma=2.0))
    np.testing.assert_allclose(np.asarray(out), np.asarray(ref), rtol=1e-5, atol=1e-6)

    print("KERNEL_OK")
</pallas_src>

<mosaic_0001>
module attributes {stable_mosaic.version = 11 : i64} {
  func.func @_focal_loss_kernel(%arg0: i32, %arg1: i32, %arg2: memref<16x128xf32, #tpu.memory_space<vmem>>, %arg3: memref<16x128xf32, #tpu.memory_space<vmem>>, %arg4: memref<1x8x128xf32, #tpu.memory_space<vmem>>) attributes {dimension_semantics = [#tpu.dimension_semantics<parallel>, #tpu.dimension_semantics<arbitrary>], iteration_bounds = array<i64: 1, 1>, scalar_prefetch = 0 : i64, scratch_operands = 0 : i64, tpu.core_type = #tpu.core_type<tc>, window_params = [{transform_indices = @transform_0, window_bounds = array<i64: 16, 128>}, {transform_indices = @transform_1, window_bounds = array<i64: 16, 128>}, {transform_indices = @transform_2, window_bounds = array<i64: 1, 8, 128>}]} {
    %c0_i32 = arith.constant 0 : i32
    %0 = arith.cmpi eq, %arg1, %c0_i32 : i32
    %1 = arith.extui %0 : i1 to i32
    %c0_i32_0 = arith.constant 0 : i32
    %2 = arith.cmpi ne, %1, %c0_i32_0 : i32
    scf.if %2 {
      %cst_14 = arith.constant 0.000000e+00 : f32
      %36 = vector.broadcast %cst_14 : f32 to vector<8x128xf32>
      %c0_15 = arith.constant 0 : index
      %c0_16 = arith.constant 0 : index
      %c0_17 = arith.constant 0 : index
      %37 = vector.load %arg4[%c0_15, %c0_16, %c0_17] : memref<1x8x128xf32, #tpu.memory_space<vmem>>, vector<1x8x128xf32>
      %38 = vector.shape_cast %37 : vector<1x8x128xf32> to vector<8x128xf32>
      %39 = vector.shape_cast %36 : vector<8x128xf32> to vector<1x8x128xf32>
      tpu.vector_store %arg4[%c0_15, %c0_16, %c0_17], %39 {strides = array<i32>} : memref<1x8x128xf32, #tpu.memory_space<vmem>>, vector<1x8x128xf32>,
    } else {
    }
    %cst = arith.constant 0.000000e+00 : f32
    %3 = vector.broadcast %cst : f32 to vector<8x128xf32>
    %c0_i32_1 = arith.constant 0 : i32
    %c16_i32 = arith.constant 16 : i32
    %4 = arith.muli %c0_i32_1, %c16_i32 : i32
    %5 = tpu.assume_multiple %4, 16 : i32
    %6 = arith.index_cast %5 : i32 to index
    %c0 = arith.constant 0 : index
    %7 = vector.load %arg2[%6, %c0] : memref<16x128xf32, #tpu.memory_space<vmem>>, vector<16x128xf32>
    %8 = arith.index_cast %5 : i32 to index
    %c0_2 = arith.constant 0 : index
    %9 = vector.load %arg3[%8, %c0_2] : memref<16x128xf32, #tpu.memory_space<vmem>>, vector<16x128xf32>
    %cst_3 = arith.constant 0.000000e+00 : f32
    %10 = vector.broadcast %cst_3 : f32 to vector<16x128xf32>
    %11 = arith.maximumf %7, %10 : vector<16x128xf32>
    %12 = arith.mulf %7, %9 : vector<16x128xf32>
    %13 = arith.subf %11, %12 : vector<16x128xf32>
    %14 = math.absf %7 : vector<16x128xf32>
    %cst_4 = arith.constant 0.000000e+00 : f32
    %15 = vector.broadcast %cst_4 : f32 to vector<16x128xf32>
    %16 = arith.subf %15, %14 : vector<16x128xf32>
    %17 = math.exp %16 : vector<16x128xf32>
    %18 = math.log1p %17 : vector<16x128xf32>
    %19 = arith.addf %13, %18 : vector<16x128xf32>
    %cst_5 = arith.constant 0.000000e+00 : f32
    %20 = vector.broadcast %cst_5 : f32 to vector<16x128xf32>
    %21 = arith.subf %20, %19 : vector<16x128xf32>
    %22 = math.exp %21 : vector<16x128xf32>
    %cst_6 = arith.constant 1.000000e+00 : f32
    %23 = vector.broadcast %cst_6 : f32 to vector<16x128xf32>
    %24 = arith.subf %23, %22 : vector<16x128xf32>
    %25 = arith.mulf %24, %24 : vector<16x128xf32>
    %26 = arith.mulf %25, %19 : vector<16x128xf32>
    %27 = vector.shape_cast %26 : vector<16x128xf32> to vector<2x8x128xf32>
    %cst_7 = arith.constant dense<0.000000e+00> : vector<8x128xf32>
    %28 = vector.multi_reduction <add>, %27, %cst_7 [0] : vector<2x8x128xf32> to vector<8x128xf32>
    %29 = arith.addf %3, %28 : vector<8x128xf32>
    %c1_i32 = arith.constant 1 : i32
    %c0_8 = arith.constant 0 : index
    %c0_9 = arith.constant 0 : index
    %c0_10 = arith.constant 0 : index
    %30 = vector.load %arg4[%c0_8, %c0_9, %c0_10] : memref<1x8x128xf32, #tpu.memory_space<vmem>>, vector<1x8x128xf32>
    %31 = vector.shape_cast %30 : vector<1x8x128xf32> to vector<8x128xf32>
    %32 = arith.addf %31, %29 : vector<8x128xf32>
    %c0_11 = arith.constant 0 : index
    %c0_12 = arith.constant 0 : index
    %c0_13 = arith.constant 0 : index
    %33 = vector.load %arg4[%c0_11, %c0_12, %c0_13] : memref<1x8x128xf32, #tpu.memory_space<vmem>>, vector<1x8x128xf32>
    %34 = vector.shape_cast %33 : vector<1x8x128xf32> to vector<8x128xf32>
    %35 = vector.shape_cast %32 : vector<8x128xf32> to vector<1x8x128xf32>
    tpu.vector_store %arg4[%c0_11, %c0_12, %c0_13], %35 {strides = array<i32>} : memref<1x8x128xf32, #tpu.memory_space<vmem>>, vector<1x8x128xf32>,
    return
  }
  func.func @transform_0(%arg0: i32, %arg1: i32) -> (i32, i32) {
    %c1_i32 = arith.constant 1 : i32
    %0 = arith.muli %arg0, %c1_i32 : i32
    %1 = arith.addi %0, %arg1 : i32
    %c0_i32 = arith.constant 0 : i32
    %c0_i32_0 = arith.constant 0 : i32
    return %1, %c0_i32 : i32, i32
  }
  func.func @transform_1(%arg0: i32, %arg1: i32) -> (i32, i32) {
    %c1_i32 = arith.constant 1 : i32
    %0 = arith.muli %arg0, %c1_i32 : i32
    %1 = arith.addi %0, %arg1 : i32
    %c0_i32 = arith.constant 0 : i32
    %c0_i32_0 = arith.constant 0 : i32
    return %1, %c0_i32 : i32, i32
  }
  func.func @transform_2(%arg0: i32, %arg1: i32) -> (i32, i32, i32) {
    %c0_i32 = arith.constant 0 : i32
    %c0_i32_0 = arith.constant 0 : i32
    %c0_i32_1 = arith.constant 0 : i32
    return %arg0, %c0_i32, %c0_i32_0 : i32, i32, i32
  }
}

</mosaic_0001>

<llo_original>
// kernel: tpu_custom_call.1
$region0: #{tpu_custom_call.1}
  #allocation0 [shape = 'u32[]', space=smem, size = 0x4, offset = 0x4, fixed_abs, tag = 'smem constant byte address 0x4 - core index']
  #allocation1 [shape = 'u32[144,128]{1,0:T(1,128)}', space=vmem, size = 0x12000, scoped, tag = 'internal scratch']
  %s0 = inlined_call_operand.hbm [shape: f32[16,128], index: 0, kind: input, shape index: {}]
  %s1 = inlined_call_operand.hbm [shape: f32[16,128], index: 1, kind: input, shape index: {}]
  %s2 = inlined_call_operand.hbm [shape: f32[1,8,128], index: 2, kind: output, shape index: {}]
  %s3 = sld [smem:[#allocation0]]
  $region30: #{tpu_custom_call.1} parent=0
    _
  %s5 = ssub.s32 1, %s3
  %s6 = scalar_select 0, %s5, %s3
  $region1: #{tpu_custom_call.1} parent=0
    #allocation2 [shape = 'u8[8192]{0}', space=vmem, size = 0x2000, scoped, tag = 'input window, operand 0, single buffered']
    #allocation3 [shape = 's32[1]{0}', space=sflag, size = 0x4, scoped, tag = 'scoped memory for tpu_custom_call.1']
    #allocation4 [shape = 's32[1]{0}', space=sflag, size = 0x4, scoped, tag = 'scoped memory for tpu_custom_call.1']
    #allocation5 [shape = 'u8[8192]{0}', space=vmem, size = 0x2000, scoped, tag = 'input window, operand 1, single buffered']
    #allocation6 [shape = 's32[1]{0}', space=sflag, size = 0x4, scoped, tag = 'scoped memory for tpu_custom_call.1']
    #allocation7 [shape = 'u8[4096]{0}', space=vmem, size = 0x1000, scoped, tag = 'output window, operand 0, single buffered']
    %7 = vsyncpa [#allocation3], 0
    %8 = vsyncpa [#allocation6], 0
    %9 = vsyncpa [#allocation4], 0
    // Predicated region
    $region2: #{tpu_custom_call.1} parent=1 // pred_check
      _
    $region3: #{tpu_custom_call.1} parent=1 // pred_check_branch
      %11 = sbr.rel (0) target = $region5
    $region4: #{tpu_custom_call.1} parent=1 // pred_region
      %s12 = sadd.s32 0, 0
      %s13 = smul.u32 2, %s12
      %s15 = ssub.s32 256, 256
      %16 = vsyncadd [#allocation3], %s15
      %s17 = smul.addr %s13, 128
      %s18 = scalar_lea.hbm %s0, %s17
      %s19 = sshll.u32 [#allocation2], 4
      %s20 = int_to_ptr.vmem [resolvable:$true] %s19
      %25 = dma.hbm_to_vmem [thread:$0]  %s18, 256, %s20, [#allocation3], 128, 128, 8
    $region5: #{tpu_custom_call.1} parent=1 // pred_fallthru
      _
    // Predicated region
    $region6: #{tpu_custom_call.1} parent=1 // pred_check
      _
    $region7: #{tpu_custom_call.1} parent=1 // pred_check_branch
      %27 = sbr.rel (0) target = $region9
    $region8: #{tpu_custom_call.1} parent=1 // pred_region
      %s28 = sadd.s32 0, 0
      %s29 = smul.u32 2, %s28
      %s31 = ssub.s32 256, 256
      %32 = vsyncadd [#allocation6], %s31
      %s33 = smul.addr %s29, 128
      %s34 = scalar_lea.hbm %s1, %s33
      %s35 = sshll.u32 [#allocation5], 4
      %s36 = int_to_ptr.vmem [resolvable:$true] %s35
      %41 = dma.hbm_to_vmem [thread:$0]  %s34, 256, %s36, [#allocation6], 128, 128, 8
    $region9: #{tpu_custom_call.1} parent=1 // pred_fallthru
      _
    // Predicated region
    $region10: #{tpu_custom_call.1} parent=1 // pred_check
      _
    $region11: #{tpu_custom_call.1} parent=1 // pred_check_branch
      %43 = sbr.rel (0) target = $region13
    $region12: #{tpu_custom_call.1} parent=1 // pred_region
      %44 = dma.done [#allocation3], 256
    $region13: #{tpu_custom_call.1} parent=1 // pred_fallthru
      _
    // Predicated region
    $region14: #{tpu_custom_call.1} parent=1 // pred_check
      _
    $region15: #{tpu_custom_call.1} parent=1 // pred_check_branch
      %46 = sbr.rel (0) target = $region17
    $region16: #{tpu_custom_call.1} parent=1 // pred_region
      %47 = dma.done [#allocation6], 256
    $region17: #{tpu_custom_call.1} parent=1 // pred_fallthru
      _
    %s48 = sadd.s32 0, 0
    %s49 = smul.u32 2, %s48
    %s50 = sadd.s32 0, 0
    %s51 = smul.u32 2, %s50
    %p52 = scmp.eq.s32.totalorder 0, 0
    // Predicated region
    $region18: #{tpu_custom_call.1} parent=1 // pred_check
      %p53 = pneg %p52
    $region19: #{tpu_custom_call.1} parent=1 // pred_check_branch
      %55 = sbr.rel (%p53) target = $region21
    $region20: #{tpu_custom_call.1} parent=1 // pred_region
      %56 = vst [vmem:[#allocation7] sm:$0xff] 0.0
    $region21: #{tpu_custom_call.1} parent=1 // pred_fallthru
      _
    %v57 = vld [vmem:[#allocation2] sm:$0xff]
    %v58 = vld [vmem:[#allocation2 + $0x8] sm:$0xff]
    %v59 = vld [vmem:[#allocation5] sm:$0xff]
    %v60 = vld [vmem:[#allocation5 + $0x8] sm:$0xff]
    %v61 = vmax.f32 %v57, 0.0
    %v62 = vmax.f32 %v58, 0.0
    %v63 = vmul.f32 %v57, %v59
    %v64 = vmul.f32 %v58, %v60
    %v65 = vsub.f32 %v61, %v63
    %v66 = vsub.f32 %v62, %v64
    %v67 = vand.u32 2147483647, %v57
    %v68 = vand.u32 2147483647, %v58
    %v69 = vsub.f32 0.0, %v67
    %v70 = vsub.f32 0.0, %v68
    %v71 = vmul.f32 %v69, 1.442695
    %v72 = vpow.pop %v71
    %v73 = vmul.f32 %v70, 1.442695
    %v74 = vpow.pop %v73
    %v75 = vadd.f32 %v72, 1.0
    %v76 = vlog2.pop %v75
    %v77 = vmul.f32 %v76, 0.6931472
    %v78 = vmul.f32 -0.5, %v72
    %v79 = vadd.f32 %v78, 1.0
    %v80 = vmul.f32 %v79, %v72
    %v81 = vand.u32 2147483647, %v72
    %vm82 = vcmp.lt.f32.partialorder %v81, 0.0004427343
    %v83 = vsel %vm82, %v80, %v77
    %v84 = vadd.f32 %v74, 1.0
    %v85 = vlog2.pop %v84
    %v86 = vmul.f32 %v85, 0.6931472
    %v87 = vmul.f32 -0.5, %v74
    %v88 = vadd.f32 %v87, 1.0
    %v89 = vmul.f32 %v88, %v74
    %v90 = vand.u32 2147483647, %v74
    %vm91 = vcmp.lt.f32.partialorder %v90, 0.0004427343
    %v92 = vsel %vm91, %v89, %v86
    %v93 = vadd.f32 %v65, %v83
    %v94 = vadd.f32 %v66, %v92
    %v95 = vsub.f32 0.0, %v93
    %v96 = vsub.f32 0.0, %v94
    %v97 = vmul.f32 %v95, 1.442695
    %v98 = vpow.pop %v97
    %v99 = vmul.f32 %v96, 1.442695
    %v100 = vpow.pop %v99
    %v101 = vsub.f32 1.0, %v98
    %v102 = vsub.f32 1.0, %v100
    %v103 = vmul.f32 %v101, %v101
    %v104 = vmul.f32 %v102, %v102
    %v105 = vmul.f32 %v103, %v93
    %v106 = vmul.f32 %v104, %v94
    %v107 = vadd.f32 %v105, %v106
    %v108 = vadd.f32 %v107, 0.0
    %v109 = vld [vmem:[#allocation7] sm:$0xff]
    %v110 = vadd.f32 %v109, %v108
    %111 = vst [vmem:[#allocation7] sm:$0xff] %v110
    // Predicated region
    $region22: #{tpu_custom_call.1} parent=1 // pred_check
      _
    $region23: #{tpu_custom_call.1} parent=1 // pred_check_branch
      %113 = sbr.rel (0) target = $region25
    $region24: #{tpu_custom_call.1} parent=1 // pred_region
      %s115 = ssub.s32 128, 128
      %116 = vsyncadd [#allocation4], %s115
      %s118 = sshll.u32 [#allocation7], 4
      %s119 = int_to_ptr.vmem [resolvable:$true] %s118
      %121 = dma.vmem_to_hbm [thread:$0]  %s119, 128, %s2, [#allocation4]
    $region25: #{tpu_custom_call.1} parent=1 // pred_fallthru
      _
    // Predicated region
    $region26: #{tpu_custom_call.1} parent=1 // pred_check
      _
    $region27: #{tpu_custom_call.1} parent=1 // pred_check_branch
      %123 = sbr.rel (0) target = $region29
    $region28: #{tpu_custom_call.1} parent=1 // pred_region
      %124 = dma.done [#allocation4], 128
    $region29: #{tpu_custom_call.1} parent=1 // pred_fallthru
      _
    %125 = vsyncpa [#allocation3], 1
    %126 = vsyncpa [#allocation6], 1
    %127 = vsyncpa [#allocation4], 1

</llo_original>
